<compile_context>
chip_gen: v7x
topology: tpu7x:2x2x1
jax: 0.10.0
libtpu: 0.0.40
codegen_flags: <defaults>
</compile_context>

<pallas_src>
import jax
import jax.numpy as jnp
from jax.experimental import pallas as pl
from jax.experimental.pallas import tpu as pltpu


def _round_up(x, m):
    return ((x + m - 1) // m) * m


def _cdiv(a, b):
    return (a + b - 1) // b


def _probe_kernel(x_ref, w_ref, b_ref, o_ref):
    # x_ref: (tm, K), w_ref: (K, N), b_ref: (1, N), o_ref: (tm, N)
    acc = jnp.dot(x_ref[...], w_ref[...], preferred_element_type=jnp.float32)
    o_ref[...] = (acc + b_ref[...].astype(jnp.float32)).astype(o_ref.dtype)


_MAX_TM = 4096
# Below this many input elements a fused XLA `x @ w + b` beats the cost of a
# pallas_call launch + pipeline overhead.
_MIN_PALLAS_INPUT_ELEMS = 1 << 20


def _chip_config():
    """Per-generation (vmem_budget_bytes, vmem_limit_bytes, num_tensorcores)."""
    budget, limit, num_tc = 24 << 20, 32 << 20, 1   # safe defaults
    kind = ""
    try:
        kind = jax.devices()[0].device_kind.lower()
    except Exception:
        pass
    vmem_cap = None
    try:
        vmem_cap = int(pltpu.get_tpu_info().vmem_capacity_bytes)
    except Exception:
        vmem_cap = None
    if vmem_cap is None:
        if "v7" in kind:
            vmem_cap = 64 << 20
        elif kind:
            vmem_cap = 128 << 20
    if vmem_cap is not None:
        if vmem_cap <= (80 << 20):          # v7x: 64 MiB per TensorCore
            budget, limit, num_tc = 44 << 20, 56 << 20, 2
        else:                               # v5e / v6e: 128 MiB physical
            budget, limit, num_tc = 96 << 20, 112 << 20, 1
    if "v7" in kind:
        num_tc = 2
    return budget, limit, num_tc


def dependency_probe_forward(embeddings, weight, bias, *, tm=None,
                             use_pallas=None, compute_dtype=None):
    """Pallas equivalent of DependencyProbe.forward (a Linear layer).

    embeddings:    [batch, seq, input_dim] (or [M, input_dim])
    weight:        [input_dim, num_relations]  (transposed vs torch's [out, in])
    bias:          [num_relations]
    tm:            optional row-tile override (auto-sized otherwise)
    use_pallas:    force/skip the Pallas path (default: size-based dispatch)
    compute_dtype: optional (e.g. jnp.bfloat16). Only taken when the
                   embeddings are ALREADY in that dtype (otherwise a wrapper
                   cast would add a full extra HBM pass); weight is cast to
                   match (cheap). MXU still accumulates in f32.
    returns:       [batch, seq, num_relations]
    """
    orig_shape = embeddings.shape
    K = orig_shape[-1]
    N = weight.shape[-1]
    out_dtype = embeddings.dtype

    x = embeddings.reshape(-1, K)
    M = x.shape[0]

    # --- Empty batch guard ----------------------------------------------------
    if M == 0:
        return jnp.zeros((*orig_shape[:-1], N), out_dtype)

    # --- Tiny-problem fallback: fused XLA wins below the launch-cost floor ----
    if use_pallas is None:
        use_pallas = (M * K) >= _MIN_PALLAS_INPUT_ELEMS
    if not use_pallas:
        out = (jnp.dot(x, weight) + bias).astype(out_dtype)
        return out.reshape(*orig_shape[:-1], N)

    # bf16 path only when x already lives in that dtype (no wrapper HBM pass).
    if compute_dtype is not None and x.dtype == jnp.dtype(compute_dtype):
        weight = weight.astype(compute_dtype)

    itemsize = jnp.dtype(x.dtype).itemsize
    sublane = max(8, 32 // itemsize)        # 8 rows f32, 16 bf16, 32 int8
    wb_itemsize = jnp.dtype(weight.dtype).itemsize
    b_itemsize = jnp.dtype(bias.dtype).itemsize
    out_itemsize = jnp.dtype(out_dtype).itemsize
    b2d = bias.reshape(1, N)

    vmem_budget, vmem_limit, num_tc = _chip_config()

    # Weight/bias blocks never change (constant index_map) so they stay
    # VMEM-resident.  For very large K, single-buffer them (no perf cost: the
    # block never re-DMAs) to free headroom for a bigger row tile.
    wb_bytes = K * N * wb_itemsize
    single_buffer_w = wb_bytes > (4 << 20)
    w_copies = 1 if single_buffer_w else 2
    if single_buffer_w:
        w_spec = pl.BlockSpec((K, N), lambda i: (0, 0),
                              pipeline_mode=pl.Buffered(1))
        b_spec = pl.BlockSpec((1, N), lambda i: (0, 0),
                              pipeline_mode=pl.Buffered(1))
    else:
        w_spec = pl.BlockSpec((K, N), lambda i: (0, 0))
        b_spec = pl.BlockSpec((1, N), lambda i: (0, 0))

    # --- Row-tile selection (VMEM accounting matches the buffering choice) ----
    if tm is None:
        fixed = w_copies * wb_bytes + w_copies * N * b_itemsize
        per_row = 2 * K * itemsize + 2 * N * out_itemsize   # double-buffered x/out
        avail = max(vmem_budget - fixed, per_row * sublane)
        tm = min(_MAX_TM, max(sublane, (avail // per_row) // sublane * sublane))
    else:
        tm = max(sublane, _round_up(tm, sublane))
    # Never allocate a tile larger than the (sublane-rounded) problem.
    tm = min(tm, max(sublane, _round_up(M, sublane)))

    if num_tc >= 2 and M > sublane:
        # Keep >= 2 grid steps so both TensorCores get work, and keep the step
        # count even so the "parallel" axis splits evenly across the 2 TCs.
        tm = min(tm, max(sublane, _round_up(_cdiv(M, 2), sublane)))
        steps = _cdiv(M, tm)
        if steps > 1 and steps % 2 == 1:
            tm2 = max(sublane, _round_up(_cdiv(M, steps + 1), sublane))
            if _cdiv(M, tm2) % 2 == 0:
                tm = tm2

    grid_m = _cdiv(M, tm)   # ragged last block is fine: no jnp.pad of x

    cost = pl.CostEstimate(
        flops=2 * M * K * N,
        bytes_accessed=(M * K * itemsize + K * N * wb_itemsize
                        + M * N * out_itemsize),
        transcendentals=0,
    )

    out = pl.pallas_call(
        _probe_kernel,
        out_shape=jax.ShapeDtypeStruct((M, N), out_dtype),
        grid_spec=pltpu.PrefetchScalarGridSpec(
            num_scalar_prefetch=0,
            grid=(grid_m,),
            in_specs=[
                pl.BlockSpec((tm, K), lambda i: (i, 0)),   # x row-tile (streamed)
                w_spec,                                    # full weight (resident)
                b_spec,                                    # bias (resident)
            ],
            out_specs=pl.BlockSpec((tm, N), lambda i: (i, 0)),
        ),
        compiler_params=pltpu.CompilerParams(
            dimension_semantics=("parallel",),
            vmem_limit_bytes=vmem_limit),
        cost_estimate=cost,
    )(x, weight, b2d)

    return out.reshape(*orig_shape[:-1], N)


if __name__ == "__main__":
    key = jax.random.PRNGKey(0)
    k_x, k_w, k_b, k_x2 = jax.random.split(key, 4)

    # Module config (train_toks='tail' -> actual_input_dim == input_dim).
    input_dim = 32
    num_relations = 16
    weight = jax.random.normal(k_w, (input_dim, num_relations), jnp.float32) * 0.02
    bias = jax.random.normal(k_b, (num_relations,), jnp.float32) * 0.01

    # 1) Small shape with the Pallas path forced (default dispatch would route
    #    a problem this small to fused XLA).
    batch, seq = 2, 8
    emb = jax.random.normal(k_x, (batch, seq, input_dim), jnp.float32)
    out = jax.block_until_ready(
        dependency_probe_forward(emb, weight, bias, use_pallas=True))
    ref = emb @ weight + bias
    assert out.shape == (batch, seq, num_relations)
    assert jnp.allclose(out, ref, atol=1e-5, rtol=1e-5)

    # 2) Ragged M (batch*seq = 111 rows, not a tile multiple) through the same
    #    kernel: cdiv grid, no wrapper-side padding copy.
    batch2, seq2 = 3, 37
    emb2 = jax.random.normal(k_x2, (batch2, seq2, input_dim), jnp.float32)
    out2 = jax.block_until_ready(
        dependency_probe_forward(emb2, weight, bias, use_pallas=True))
    ref2 = emb2 @ weight + bias
    assert out2.shape == (batch2, seq2, num_relations)
    assert jnp.allclose(out2, ref2, atol=1e-5, rtol=1e-5)

    # 3) Default dispatch: tiny problem falls back to fused XLA, same semantics.
    out3 = jax.block_until_ready(dependency_probe_forward(emb, weight, bias))
    assert jnp.allclose(out3, ref, atol=1e-5, rtol=1e-5)

    print("KERNEL_OK")
</pallas_src>

<mosaic_0001>
module attributes {stable_mosaic.version = 11 : i64} {
  func.func @_probe_kernel(%arg0: i32, %arg1: memref<16x32xf32, #tpu.memory_space<vmem>>, %arg2: memref<32x16xf32, #tpu.memory_space<vmem>>, %arg3: memref<1x16xf32, #tpu.memory_space<vmem>>, %arg4: memref<16x16xf32, #tpu.memory_space<vmem>>) attributes {dimension_semantics = [#tpu.dimension_semantics<parallel>], iteration_bounds = array<i64: 1>, scalar_prefetch = 0 : i64, scratch_operands = 0 : i64, tpu.core_type = #tpu.core_type<tc>, window_params = [{transform_indices = @transform_0, window_bounds = array<i64: 16, 32>}, {pipeline_mode = #tpu.pipeline_mode<synchronous>, transform_indices = @transform_1, window_bounds = array<i64: 32, 16>}, {pipeline_mode = #tpu.pipeline_mode<synchronous>, transform_indices = @transform_2, window_bounds = array<i64: 1, 16>}, {transform_indices = @transform_3, window_bounds = array<i64: 16, 16>}]} {
    %c0 = arith.constant 0 : index
    %c0_0 = arith.constant 0 : index
    %0 = vector.load %arg1[%c0, %c0_0] : memref<16x32xf32, #tpu.memory_space<vmem>>, vector<16x32xf32>
    %c0_1 = arith.constant 0 : index
    %c0_2 = arith.constant 0 : index
    %1 = vector.load %arg2[%c0_1, %c0_2] : memref<32x16xf32, #tpu.memory_space<vmem>>, vector<32x16xf32>
    %cst = arith.constant dense<0.000000e+00> : vector<16x16xf32>
    %2 = tpu.matmul %0, %1, %cst {dimension_numbers = #tpu.dot_dimension_numbers<[1], [0], [0], [1], [0, 0, 1, 1], [], []>} : vector<16x32xf32>, vector<32x16xf32>, vector<16x16xf32> -> vector<16x16xf32>
    %c0_3 = arith.constant 0 : index
    %c0_4 = arith.constant 0 : index
    %3 = vector.load %arg3[%c0_3, %c0_4] : memref<1x16xf32, #tpu.memory_space<vmem>>, vector<1x16xf32>
    %4 = vector.broadcast %3 : vector<1x16xf32> to vector<16x16xf32>
    %5 = arith.addf %2, %4 : vector<16x16xf32>
    %c0_5 = arith.constant 0 : index
    %c0_6 = arith.constant 0 : index
    %6 = vector.load %arg4[%c0_5, %c0_6] : memref<16x16xf32, #tpu.memory_space<vmem>>, vector<16x16xf32>
    tpu.vector_store %arg4[%c0_5, %c0_6], %5 {strides = array<i32>} : memref<16x16xf32, #tpu.memory_space<vmem>>, vector<16x16xf32>,
    return
  }
  func.func @transform_0(%arg0: i32) -> (i32, i32) {
    %c0_i32 = arith.constant 0 : i32
    %c0_i32_0 = arith.constant 0 : i32
    return %arg0, %c0_i32 : i32, i32
  }
  func.func @transform_1(%arg0: i32) -> (i32, i32) {
    %c0_i32 = arith.constant 0 : i32
    %c0_i32_0 = arith.constant 0 : i32
    %c0_i32_1 = arith.constant 0 : i32
    return %c0_i32, %c0_i32_0 : i32, i32
  }
  func.func @transform_2(%arg0: i32) -> (i32, i32) {
    %c0_i32 = arith.constant 0 : i32
    %c0_i32_0 = arith.constant 0 : i32
    %c0_i32_1 = arith.constant 0 : i32
    return %c0_i32, %c0_i32_0 : i32, i32
  }
  func.func @transform_3(%arg0: i32) -> (i32, i32) {
    %c0_i32 = arith.constant 0 : i32
    %c0_i32_0 = arith.constant 0 : i32
    return %arg0, %c0_i32 : i32, i32
  }
}

</mosaic_0001>

<llo_original>
// kernel: tpu_custom_call.1
$region0: #{tpu_custom_call.1}
  #allocation0 [shape = 'u32[]', space=smem, size = 0x4, offset = 0x4, fixed_abs, tag = 'smem constant byte address 0x4 - core index']
  #allocation1 [shape = 'u32[144,128]{1,0:T(1,128)}', space=vmem, size = 0x12000, scoped, tag = 'internal scratch']
  %s0 = inlined_call_operand.hbm [shape: f32[16,32], index: 0, kind: input, shape index: {}]
  %s1 = inlined_call_operand.hbm [shape: f32[32,16], index: 1, kind: input, shape index: {}]
  %s2 = inlined_call_operand.hbm [shape: f32[1,16], index: 2, kind: input, shape index: {}]
  %s3 = inlined_call_operand.hbm [shape: f32[16,16], index: 3, kind: output, shape index: {}]
  %s4 = sld [smem:[#allocation0]]
  $region34: #{tpu_custom_call.1} parent=0
    _
  %s6 = ssub.s32 1, %s4
  %s7 = scalar_select 0, %s6, %s4
  $region1: #{tpu_custom_call.1} parent=0
    #allocation2 [shape = 'u8[8192]{0}', space=vmem, size = 0x2000, scoped, tag = 'input window, operand 0, single buffered']
    #allocation3 [shape = 's32[1]{0}', space=sflag, size = 0x4, scoped, tag = 'scoped memory for tpu_custom_call.1']
    #allocation4 [shape = 's32[1]{0}', space=sflag, size = 0x4, scoped, tag = 'scoped memory for tpu_custom_call.1']
    #allocation5 [shape = 'u8[16384]{0}', space=vmem, size = 0x4000, scoped, tag = 'input window, operand 1, single buffered']
    #allocation6 [shape = 's32[1]{0}', space=sflag, size = 0x4, scoped, tag = 'scoped memory for tpu_custom_call.1']
    #allocation7 [shape = 'u8[512]{0}', space=vmem, size = 0x400, scoped, tag = 'input window, operand 2, single buffered']
    #allocation8 [shape = 'u8[8192]{0}', space=vmem, size = 0x2000, scoped, tag = 'output window, operand 0, single buffered']
    %8 = vsyncpa [#allocation3], 0
    %9 = vsyncpa [#allocation6], 0
    %10 = vsyncpa [#allocation4], 0
    // Predicated region
    $region2: #{tpu_custom_call.1} parent=1 // pred_check
      _
    $region3: #{tpu_custom_call.1} parent=1 // pred_check_branch
      %12 = sbr.rel (0) target = $region5
    $region4: #{tpu_custom_call.1} parent=1 // pred_region
      %s14 = ssub.s32 256, 256
      %15 = vsyncadd [#allocation3], %s14
      %s16 = sshll.u32 [#allocation2], 4
      %s17 = int_to_ptr.vmem [resolvable:$true] %s16
      %22 = dma.hbm_to_vmem [thread:$0]  %s0, 256, %s17, [#allocation3], 128, 128, 8
    $region5: #{tpu_custom_call.1} parent=1 // pred_fallthru
      _
    // Predicated region
    $region6: #{tpu_custom_call.1} parent=1 // pred_check
      _
    $region7: #{tpu_custom_call.1} parent=1 // pred_check_branch
      %24 = sbr.rel (0) target = $region9
    $region8: #{tpu_custom_call.1} parent=1 // pred_region
      %s26 = ssub.s32 512, 512
      %27 = vsyncadd [#allocation6], %s26
      %s28 = sshll.u32 [#allocation5], 4
      %s29 = int_to_ptr.vmem [resolvable:$true] %s28
      %34 = dma.hbm_to_vmem [thread:$0]  %s1, 512, %s29, [#allocation6], 128, 128, 8
    $region9: #{tpu_custom_call.1} parent=1 // pred_fallthru
      _
    // Predicated region
    $region10: #{tpu_custom_call.1} parent=1 // pred_check
      _
    $region11: #{tpu_custom_call.1} parent=1 // pred_check_branch
      %36 = sbr.rel (0) target = $region13
    $region12: #{tpu_custom_call.1} parent=1 // pred_region
      %s38 = ssub.s32 16, 16
      %39 = vsyncadd [#allocation6], %s38
      %s41 = sshll.u32 [#allocation7], 4
      %s42 = int_to_ptr.vmem [resolvable:$true] %s41
      %44 = dma.hbm_to_vmem [thread:$0]  %s2, 16, %s42, [#allocation6]
    $region13: #{tpu_custom_call.1} parent=1 // pred_fallthru
      _
    // Predicated region
    $region14: #{tpu_custom_call.1} parent=1 // pred_check
      _
    $region15: #{tpu_custom_call.1} parent=1 // pred_check_branch
      %46 = sbr.rel (0) target = $region17
    $region16: #{tpu_custom_call.1} parent=1 // pred_region
      %47 = dma.done [#allocation3], 256
    $region17: #{tpu_custom_call.1} parent=1 // pred_fallthru
      _
    // Predicated region
    $region18: #{tpu_custom_call.1} parent=1 // pred_check
      _
    $region19: #{tpu_custom_call.1} parent=1 // pred_check_branch
      %49 = sbr.rel (0) target = $region21
    $region20: #{tpu_custom_call.1} parent=1 // pred_region
      %50 = dma.done [#allocation6], 512
    $region21: #{tpu_custom_call.1} parent=1 // pred_fallthru
      _
    // Predicated region
    $region22: #{tpu_custom_call.1} parent=1 // pred_check
      _
    $region23: #{tpu_custom_call.1} parent=1 // pred_check_branch
      %52 = sbr.rel (0) target = $region25
    $region24: #{tpu_custom_call.1} parent=1 // pred_region
      %53 = dma.done [#allocation6], 16
    $region25: #{tpu_custom_call.1} parent=1 // pred_fallthru
      _
    %v54 = vld [vmem:[#allocation2] sm:$0xff]
    %v55 = vld [vmem:[#allocation2 + $0x8] sm:$0xff]
    %v56 = vld [vmem:[#allocation5] sm:$0xff]
    %v57 = vld [vmem:[#allocation5 + $0x8] sm:$0xff]
    %v58 = vld [vmem:[#allocation5 + $0x10] sm:$0xff]
    %v59 = vld [vmem:[#allocation5 + $0x18] sm:$0xff]
    %v60 = vld [vmem:[#allocation7] sm:$0x1]
    %v62 = vlaneseq
    %v63 = vshrl.u32 %v62, 7
    %v64 = vsub.s32 0, %v63
    %v65 = vrot.slane %v60, %v64
    %vm67 = vcmask 261120
    %v69 = vsel %vm67, %v54, 0
    %v72 = vsel %vm67, %v55, 0
    %74 = vmatprep.subr.mxu0 0.0
    %75 = vmatpush1.msra.mxu0 %v56
    %76 = vmatprep.subr.mxu0 0.0
    %77 = vmatpush1.msra.mxu0 %v57
    %78 = vmatprep.subr.mxu0 0.0
    %79 = vmatpush1.msra.mxu0 %v58
    %80 = vmatprep.subr.mxu0 0.0
    %81 = vmatpush1.msra.mxu0 %v59
    %82 = vmatprep.subr.mxu0 0.0
    %83 = vmatpush1.msra.mxu0 0.0
    %84 = vmatprep.subr.mxu0 0.0
    %85 = vmatpush1.msra.mxu0 0.0
    %86 = vmatprep.subr.mxu0 0.0
    %87 = vmatpush1.msra.mxu0 0.0
    %88 = vmatprep.subr.mxu0 0.0
    %89 = vmatpush1.msra.mxu0 0.0
    %90 = vmatprep.subr.mxu0 0.0
    %91 = vmatpush1.msra.mxu0 0.0
    %92 = vmatprep.subr.mxu0 0.0
    %93 = vmatpush1.msra.mxu0 0.0
    %94 = vmatprep.subr.mxu0 0.0
    %95 = vmatpush1.msra.mxu0 0.0
    %96 = vmatprep.subr.mxu0 0.0
    %97 = vmatpush1.msra.mxu0 0.0
    %98 = vmatprep.subr.mxu0 0.0
    %99 = vmatpush1.msra.mxu0 0.0
    %100 = vmatprep.subr.mxu0 0.0
    %101 = vmatpush1.msra.mxu0 0.0
    %102 = vmatprep.subr.mxu0 0.0
    %103 = vmatpush1.msra.mxu0 0.0
    %104 = vmatprep.subr.mxu0 0.0
    %105 = vmatpush1.msra.mxu0 0.0
    %106 = vmatprep.subr.mxu0 0.0
    %107 = vmatpush1.msra.mxu0 0.0
    %108 = vmatprep.subr.mxu0 0.0
    %109 = vmatpush1.msra.mxu0 0.0
    %110 = vmatprep.subr.mxu0 0.0
    %111 = vmatpush1.msra.mxu0 0.0
    %112 = vmatprep.subr.mxu0 0.0
    %113 = vmatpush1.msra.mxu0 0.0
    %114 = vmatprep.subr.mxu0 0.0
    %115 = vmatpush1.msra.mxu0 0.0
    %116 = vmatprep.subr.mxu0 0.0
    %117 = vmatpush1.msra.mxu0 0.0
    %118 = vmatprep.subr.mxu0 0.0
    %119 = vmatpush1.msra.mxu0 0.0
    %120 = vmatprep.subr.mxu0 0.0
    %121 = vmatpush1.msra.mxu0 0.0
    %122 = vmatprep.subr.mxu0 0.0
    %123 = vmatpush1.msra.mxu0 0.0
    %124 = vmatprep.subr.mxu0 0.0
    %125 = vmatpush1.msra.mxu0 0.0
    %126 = vmatprep.subr.mxu0 0.0
    %127 = vmatpush1.msra.mxu0 0.0
    %128 = vmatprep.subr.mxu0 0.0
    %129 = vmatpush1.msra.mxu0 0.0
    %130 = vmatprep.subr.mxu0 0.0
    %131 = vmatpush1.msra.mxu0 0.0
    %132 = vmatprep.subr.mxu0 0.0
    %133 = vmatpush1.msra.mxu0 0.0
    %134 = vmatprep.subr.mxu0 0.0
    %135 = vmatpush1.msra.mxu0 0.0
    %136 = vmatprep.subr.mxu0 0.0
    %137 = vmatpush1.msra.mxu0 0.0
    %138 = vmatprep.mubr.f32.mxu0 0.0
    %139 = vmatmul.mubr.f32.gmra.mrb[0].mxu0 %v69
    %v140 = vpop.f32.mrb[0].mxu0
    %v141 = vadd.f32 %v65, %v140
    %v142 = vpop.f32.mrb[0].mxu0
    %143 = vmatprep.mubr.f32.mxu0 0.0
    %144 = vmatmul.mubr.f32.gmra.mrb[0].mxu0 %v72
    %v145 = vpop.f32.mrb[0].mxu0
    %v146 = vadd.f32 %v65, %v145
    %v147 = vpop.f32.mrb[0].mxu0
    %148 = vdwg.mxu0
    %vm149 = vcmask 130048
    %150 = vst.msk [vmem:[#allocation8] sm:$0xff] %vm149, %v141
    %151 = vst.msk [vmem:[#allocation8 + $0x8] sm:$0xff] %vm149, %v146
    // Predicated region
    $region26: #{tpu_custom_call.1} parent=1 // pred_check
      _
    $region27: #{tpu_custom_call.1} parent=1 // pred_check_branch
      %153 = sbr.rel (0) target = $region29
    $region28: #{tpu_custom_call.1} parent=1 // pred_region
      %s155 = ssub.s32 256, 256
      %156 = vsyncadd [#allocation4], %s155
      %s157 = sshll.u32 [#allocation8], 4
      %s158 = int_to_ptr.vmem [resolvable:$true] %s157
      %163 = dma.vmem_to_hbm [thread:$0]  %s158, 256, %s3, [#allocation4], 128, 128, 8
    $region29: #{tpu_custom_call.1} parent=1 // pred_fallthru
      _
    // Predicated region
    $region30: #{tpu_custom_call.1} parent=1 // pred_check
      _
    $region31: #{tpu_custom_call.1} parent=1 // pred_check_branch
      %165 = sbr.rel (0) target = $region33
    $region32: #{tpu_custom_call.1} parent=1 // pred_region
      %166 = dma.done [#allocation4], 256
    $region33: #{tpu_custom_call.1} parent=1 // pred_fallthru
      _
    %167 = vsyncpa [#allocation3], 1
    %168 = vsyncpa [#allocation6], 1
    %169 = vsyncpa [#allocation4], 1

</llo_original>
